<compile_context>
chip_gen: v5e
topology: v5e:2x2
jax: 0.10.0
libtpu: 0.0.40
codegen_flags: <defaults>
</compile_context>

<pallas_src>
import math
import functools

import jax
import jax.numpy as jnp
from jax import lax
from jax.experimental import pallas as pl
from jax.experimental.pallas import tpu as pltpu


# ---------------------------------------------------------------------------
# Kernels: each grid step handles one (G, S, D) group of heads entirely in VMEM.
# ---------------------------------------------------------------------------

def _sdpa_kernel_nomask(q_ref, k_ref, v_ref, o_ref, attn_ref, *, scale):
    # blocks: q/k/v (1, G, S, D), o (1, G, S, D), attn (1, G, S, S)
    q = q_ref[0] * jnp.asarray(scale, q_ref.dtype)        # scale on Q: S*D muls
    k = k_ref[0]
    v = v_ref[0]

    # (G, S, S) = batched Q @ K^T, contracting last dims (no explicit transpose),
    # f32 MXU accumulator regardless of input dtype.
    scores = lax.dot_general(
        q, k,
        dimension_numbers=(((2,), (2,)), ((0,), (0,))),
        preferred_element_type=jnp.float32,
    )

    # numerically stable softmax over the last dim (f32 math)
    m = jnp.max(scores, axis=-1, keepdims=True)
    e = jnp.exp(scores - m)
    l = jnp.sum(e, axis=-1, keepdims=True)
    inv = pl.reciprocal(l, approx=False)                  # one recip per row
    attn = e * inv                                        # (G, S, S) f32

    # (G, S, D) = batched attn @ V; feed MXU in V's native dtype.
    out = lax.dot_general(
        attn.astype(v.dtype), v,
        dimension_numbers=(((2,), (1,)), ((0,), (0,))),
        preferred_element_type=jnp.float32,
    )

    attn_ref[0] = attn.astype(attn_ref.dtype)
    o_ref[0] = out.astype(o_ref.dtype)


def _sdpa_kernel_masked(q_ref, k_ref, v_ref, m_ref, o_ref, attn_ref, *, scale):
    # mask block is either (1, S, S) (shared across heads) or (1, G, S, S)
    # (per-head); both broadcast against the (G, S, S) scores below.
    q = q_ref[0] * jnp.asarray(scale, q_ref.dtype)
    k = k_ref[0]
    v = v_ref[0]
    mask = m_ref[0]

    scores = lax.dot_general(
        q, k,
        dimension_numbers=(((2,), (2,)), ((0,), (0,))),
        preferred_element_type=jnp.float32,
    )
    scores = jnp.where(mask == 0, jnp.float32(-1e9), scores)

    m = jnp.max(scores, axis=-1, keepdims=True)
    e = jnp.exp(scores - m)
    l = jnp.sum(e, axis=-1, keepdims=True)
    inv = pl.reciprocal(l, approx=False)
    attn = e * inv

    out = lax.dot_general(
        attn.astype(v.dtype), v,
        dimension_numbers=(((2,), (1,)), ((0,), (0,))),
        preferred_element_type=jnp.float32,
    )

    attn_ref[0] = attn.astype(attn_ref.dtype)
    o_ref[0] = out.astype(o_ref.dtype)


# ---------------------------------------------------------------------------
# Wrapper
# ---------------------------------------------------------------------------

def _heads_per_step(H, S, D, budget_bytes=4 * 1024 * 1024):
    """Largest divisor of H whose f32 working set fits a conservative VMEM budget
    (headroom left for double-buffering of both outputs, v5e's 16 MiB default)."""
    bytes_per_head = 4 * (3 * S * D + 2 * S * S + S * D)  # q,k,v + scores/attn + out
    for g in range(H, 0, -1):
        if H % g == 0 and g * bytes_per_head <= budget_bytes:
            return g
    return 1


def _prepare_mask(mask, B, H, S):
    """Return (mask_array, per_head). Shared masks stay at (B, S, S) — no H-fold
    broadcast in HBM; genuinely per-head masks fall back to (B, H, S, S)."""
    m = jnp.asarray(mask)
    try:
        shp = jnp.broadcast_shapes(m.shape, (B, 1, S, S))
    except ValueError:
        shp = None
    if shp == (B, 1, S, S):
        m_b = jnp.broadcast_to(m, (B, 1, S, S)).reshape(B, S, S)
        return m_b.astype(jnp.int32), False
    return jnp.broadcast_to(m, (B, H, S, S)).astype(jnp.int32), True


def scaled_dot_product_attention(Q, K, V, mask=None):
    """Pallas implementation of ScaledDotProductAttention.forward.

    Q, K, V: (B, H, S, D). mask: None or broadcastable to (B, H, S, S).
    Returns (output (B, H, S, D), attn (B, H, S, S)) — attn in the input dtype.
    """
    B, H, S, D = Q.shape
    assert K.shape == (B, H, S, D) and V.shape == (B, H, S, D)
    scale = 1.0 / math.sqrt(D)

    G = _heads_per_step(H, S, D)
    grid = (B, H // G)

    qkv_spec = pl.BlockSpec((1, G, S, D), lambda b, g: (b, g, 0, 0))
    attn_spec = pl.BlockSpec((1, G, S, S), lambda b, g: (b, g, 0, 0))

    out_shapes = (
        jax.ShapeDtypeStruct((B, H, S, D), Q.dtype),
        jax.ShapeDtypeStruct((B, H, S, S), Q.dtype),
    )
    cparams = pltpu.CompilerParams(
        # both axes independent -> shard across v7x's 2 TensorCores
        dimension_semantics=("parallel", "parallel"),
    )

    if mask is None:
        kernel = functools.partial(_sdpa_kernel_nomask, scale=scale)
        out, attn = pl.pallas_call(
            kernel,
            out_shape=out_shapes,
            grid=grid,
            in_specs=[qkv_spec, qkv_spec, qkv_spec],
            out_specs=(qkv_spec, attn_spec),
            compiler_params=cparams,
        )(Q, K, V)
    else:
        mask_arr, per_head = _prepare_mask(mask, B, H, S)
        if per_head:
            mask_spec = pl.BlockSpec((1, G, S, S), lambda b, g: (b, g, 0, 0))
        else:
            mask_spec = pl.BlockSpec((1, S, S), lambda b, g: (b, 0, 0))
        kernel = functools.partial(_sdpa_kernel_masked, scale=scale)
        out, attn = pl.pallas_call(
            kernel,
            out_shape=out_shapes,
            grid=grid,
            in_specs=[qkv_spec, qkv_spec, qkv_spec, mask_spec],
            out_specs=(qkv_spec, attn_spec),
            compiler_params=cparams,
        )(Q, K, V, mask_arr)

    return out, attn


# ---------------------------------------------------------------------------
# Reference + self-test
# ---------------------------------------------------------------------------

def _reference(Q, K, V, mask=None):
    d_k = Q.shape[-1]
    scores = jnp.einsum("bhqd,bhkd->bhqk", Q, K) / math.sqrt(d_k)
    if mask is not None:
        scores = jnp.where(mask == 0, -1e9, scores)
    attn = jax.nn.softmax(scores, axis=-1)
    out = jnp.einsum("bhqk,bhkd->bhqd", attn, V)
    return out, attn


if __name__ == "__main__":
    # shapes implied by the script: batch=2, seq=10, embed=32, heads=4 -> d_k=8
    B, H, S, D = 2, 4, 10, 8
    key = jax.random.PRNGKey(0)
    kq, kk, kv, km = jax.random.split(key, 4)
    Q = jax.random.normal(kq, (B, H, S, D), dtype=jnp.float32)
    K = jax.random.normal(kk, (B, H, S, D), dtype=jnp.float32)
    V = jax.random.normal(kv, (B, H, S, D), dtype=jnp.float32)

    # no-mask path (the one exercised by MultiHeadAttention in the module)
    out, attn = scaled_dot_product_attention(Q, K, V, mask=None)
    out, attn = jax.block_until_ready(out), jax.block_until_ready(attn)
    ref_out, ref_attn = _reference(Q, K, V, None)
    assert jnp.allclose(out, ref_out, atol=1e-5), "output mismatch (no mask)"
    assert jnp.allclose(attn, ref_attn, atol=1e-5), "attn mismatch (no mask)"

    # masked path (typical (B,1,1,S) padding mask, broadcast shared across heads)
    mask = (jax.random.uniform(km, (B, 1, 1, S)) > 0.2).astype(jnp.int32)
    out_m, attn_m = scaled_dot_product_attention(Q, K, V, mask=mask)
    out_m, attn_m = jax.block_until_ready(out_m), jax.block_until_ready(attn_m)
    ref_out_m, ref_attn_m = _reference(Q, K, V, mask)
    assert jnp.allclose(out_m, ref_out_m, atol=1e-5), "output mismatch (mask)"
    assert jnp.allclose(attn_m, ref_attn_m, atol=1e-5), "attn mismatch (mask)"

    print("KERNEL_OK")
</pallas_src>

<mosaic_0001>
module attributes {stable_mosaic.version = 11 : i64} {
  func.func @_sdpa_kernel_nomask(%arg0: i32, %arg1: i32, %arg2: memref<1x4x10x8xf32, #tpu.memory_space<vmem>>, %arg3: memref<1x4x10x8xf32, #tpu.memory_space<vmem>>, %arg4: memref<1x4x10x8xf32, #tpu.memory_space<vmem>>, %arg5: memref<1x4x10x8xf32, #tpu.memory_space<vmem>>, %arg6: memref<1x4x10x10xf32, #tpu.memory_space<vmem>>) attributes {dimension_semantics = [#tpu.dimension_semantics<parallel>, #tpu.dimension_semantics<parallel>], iteration_bounds = array<i64: 2, 1>, scalar_prefetch = 0 : i64, scratch_operands = 0 : i64, tpu.core_type = #tpu.core_type<tc>, window_params = [{transform_indices = @transform_0, window_bounds = array<i64: 1, 4, 10, 8>}, {transform_indices = @transform_1, window_bounds = array<i64: 1, 4, 10, 8>}, {transform_indices = @transform_2, window_bounds = array<i64: 1, 4, 10, 8>}, {transform_indices = @transform_3, window_bounds = array<i64: 1, 4, 10, 8>}, {transform_indices = @transform_4, window_bounds = array<i64: 1, 4, 10, 10>}]} {
    %c0 = arith.constant 0 : index
    %c0_0 = arith.constant 0 : index
    %c0_1 = arith.constant 0 : index
    %c0_2 = arith.constant 0 : index
    %0 = vector.load %arg2[%c0, %c0_0, %c0_1, %c0_2] : memref<1x4x10x8xf32, #tpu.memory_space<vmem>>, vector<1x4x10x8xf32>
    %1 = vector.shape_cast %0 : vector<1x4x10x8xf32> to vector<4x10x8xf32>
    %cst = arith.constant 0.353553385 : f32
    %2 = vector.broadcast %cst : f32 to vector<4x10x8xf32>
    %3 = arith.mulf %1, %2 : vector<4x10x8xf32>
    %c0_3 = arith.constant 0 : index
    %c0_4 = arith.constant 0 : index
    %c0_5 = arith.constant 0 : index
    %c0_6 = arith.constant 0 : index
    %4 = vector.load %arg3[%c0_3, %c0_4, %c0_5, %c0_6] : memref<1x4x10x8xf32, #tpu.memory_space<vmem>>, vector<1x4x10x8xf32>
    %5 = vector.shape_cast %4 : vector<1x4x10x8xf32> to vector<4x10x8xf32>
    %c0_7 = arith.constant 0 : index
    %c0_8 = arith.constant 0 : index
    %c0_9 = arith.constant 0 : index
    %c0_10 = arith.constant 0 : index
    %6 = vector.load %arg4[%c0_7, %c0_8, %c0_9, %c0_10] : memref<1x4x10x8xf32, #tpu.memory_space<vmem>>, vector<1x4x10x8xf32>
    %7 = vector.shape_cast %6 : vector<1x4x10x8xf32> to vector<4x10x8xf32>
    %cst_11 = arith.constant dense<0.000000e+00> : vector<4x10x10xf32>
    %8 = tpu.matmul %3, %5, %cst_11 {dimension_numbers = #tpu.dot_dimension_numbers<[2], [2], [1], [1], [0, 0, 0, 1, 1, 1], [0], [0]>} : vector<4x10x8xf32>, vector<4x10x8xf32>, vector<4x10x10xf32> -> vector<4x10x10xf32>
    %cst_12 = arith.constant dense<0xFF800000> : vector<4x10xf32>
    %9 = vector.multi_reduction <maximumf>, %8, %cst_12 [2] : vector<4x10x10xf32> to vector<4x10xf32>
    %10 = vector.shape_cast %9 : vector<4x10xf32> to vector<4x10x1xf32>
    %11 = vector.broadcast %10 : vector<4x10x1xf32> to vector<4x10x10xf32>
    %12 = arith.subf %8, %11 : vector<4x10x10xf32>
    %13 = math.exp %12 : vector<4x10x10xf32>
    %cst_13 = arith.constant dense<0.000000e+00> : vector<4x10xf32>
    %14 = vector.multi_reduction <add>, %13, %cst_13 [2] : vector<4x10x10xf32> to vector<4x10xf32>
    %15 = vector.shape_cast %14 : vector<4x10xf32> to vector<4x10x1xf32>
    %16 = tpu.reciprocal %15 : vector<4x10x1xf32> -> vector<4x10x1xf32>
    %17 = vector.broadcast %16 : vector<4x10x1xf32> to vector<4x10x10xf32>
    %18 = arith.mulf %13, %17 : vector<4x10x10xf32>
    %cst_14 = arith.constant dense<0.000000e+00> : vector<4x10x8xf32>
    %19 = tpu.matmul %18, %7, %cst_14 {dimension_numbers = #tpu.dot_dimension_numbers<[2], [1], [1], [2], [0, 0, 0, 1, 1, 2], [0], [0]>} : vector<4x10x10xf32>, vector<4x10x8xf32>, vector<4x10x8xf32> -> vector<4x10x8xf32>
    %c0_15 = arith.constant 0 : index
    %c0_16 = arith.constant 0 : index
    %c0_17 = arith.constant 0 : index
    %c0_18 = arith.constant 0 : index
    %20 = vector.load %arg6[%c0_15, %c0_16, %c0_17, %c0_18] : memref<1x4x10x10xf32, #tpu.memory_space<vmem>>, vector<1x4x10x10xf32>
    %21 = vector.shape_cast %20 : vector<1x4x10x10xf32> to vector<4x10x10xf32>
    %22 = vector.shape_cast %18 : vector<4x10x10xf32> to vector<1x4x10x10xf32>
    tpu.vector_store %arg6[%c0_15, %c0_16, %c0_17, %c0_18], %22 {strides = array<i32>} : memref<1x4x10x10xf32, #tpu.memory_space<vmem>>, vector<1x4x10x10xf32>,
    %c0_19 = arith.constant 0 : index
    %c0_20 = arith.constant 0 : index
    %c0_21 = arith.constant 0 : index
    %c0_22 = arith.constant 0 : index
    %23 = vector.load %arg5[%c0_19, %c0_20, %c0_21, %c0_22] : memref<1x4x10x8xf32, #tpu.memory_space<vmem>>, vector<1x4x10x8xf32>
    %24 = vector.shape_cast %23 : vector<1x4x10x8xf32> to vector<4x10x8xf32>
    %25 = vector.shape_cast %19 : vector<4x10x8xf32> to vector<1x4x10x8xf32>
    tpu.vector_store %arg5[%c0_19, %c0_20, %c0_21, %c0_22], %25 {strides = array<i32>} : memref<1x4x10x8xf32, #tpu.memory_space<vmem>>, vector<1x4x10x8xf32>,
    return
  }
  func.func @transform_0(%arg0: i32, %arg1: i32) -> (i32, i32, i32, i32) {
    %c0_i32 = arith.constant 0 : i32
    %c0_i32_0 = arith.constant 0 : i32
    %c0_i32_1 = arith.constant 0 : i32
    return %arg0, %arg1, %c0_i32, %c0_i32_0 : i32, i32, i32, i32
  }
  func.func @transform_1(%arg0: i32, %arg1: i32) -> (i32, i32, i32, i32) {
    %c0_i32 = arith.constant 0 : i32
    %c0_i32_0 = arith.constant 0 : i32
    %c0_i32_1 = arith.constant 0 : i32
    return %arg0, %arg1, %c0_i32, %c0_i32_0 : i32, i32, i32, i32
  }
  func.func @transform_2(%arg0: i32, %arg1: i32) -> (i32, i32, i32, i32) {
    %c0_i32 = arith.constant 0 : i32
    %c0_i32_0 = arith.constant 0 : i32
    %c0_i32_1 = arith.constant 0 : i32
    return %arg0, %arg1, %c0_i32, %c0_i32_0 : i32, i32, i32, i32
  }
  func.func @transform_3(%arg0: i32, %arg1: i32) -> (i32, i32, i32, i32) {
    %c0_i32 = arith.constant 0 : i32
    %c0_i32_0 = arith.constant 0 : i32
    %c0_i32_1 = arith.constant 0 : i32
    return %arg0, %arg1, %c0_i32, %c0_i32_0 : i32, i32, i32, i32
  }
  func.func @transform_4(%arg0: i32, %arg1: i32) -> (i32, i32, i32, i32) {
    %c0_i32 = arith.constant 0 : i32
    %c0_i32_0 = arith.constant 0 : i32
    %c0_i32_1 = arith.constant 0 : i32
    return %arg0, %arg1, %c0_i32, %c0_i32_0 : i32, i32, i32, i32
  }
}

</mosaic_0001>

<llo_original>
// kernel: tpu_custom_call.1
$region0: #{tpu_custom_call.1}
  #allocation0 [shape = 'u32[]', space=smem, size = 0x4, offset = 0x4, fixed_abs, tag = 'smem constant byte address 0x4 - core index']
  #allocation1 [shape = 'u32[72,128]{1,0:T(1,128)}', space=vmem, size = 0x9000, scoped, tag = 'internal scratch']
  %s0 = inlined_call_operand.vmem [shape: f32[2,4,10,8], index: 0, kind: input, shape index: {}]
  %s1 = inlined_call_operand.vmem [shape: f32[2,4,10,8], index: 1, kind: input, shape index: {}]
  %s2 = inlined_call_operand.vmem [shape: f32[2,4,10,8], index: 2, kind: input, shape index: {}]
  %s3 = inlined_call_operand.vmem [shape: f32[2,4,10,8], index: 3, kind: output, shape index: {0}]
  %s4 = inlined_call_operand.vmem [shape: f32[2,4,10,10], index: 4, kind: output, shape index: {1}]
  %5 = xla_tuple %s3, %s4
  %s6 = sld [smem:[#allocation0]]
  $region53: #{tpu_custom_call.1} parent=0
    _
  %s8 = ssub.s32 1, %s6
  %s9 = scalar_select 0, %s8, %s6
  loop: start=0, step=1, limit=4
  $region2: #{tpu_custom_call.1} parent=0 // loop_pre_header
    _
  $region3: #{tpu_custom_call.1} parent=0 // loop_header
    %s11 = sphi 0, %s15
    %p12 = scmp.ge.s32.totalorder %s11, 4
    %s18 = sphi 0, %s30
    %s19 = sphi 0, %s26
    %s20 = sphi 0, %s18
    %s21 = sphi 0, %s19
    %s22 = sphi 0, %s20
    %s23 = sphi 0, %s21
    %s35 = sphi 0, %s37
    %s38 = sphi 0, %s35
    %s39 = sphi 0, %s38
    %s55 = sphi 0, %s39
    %s63 = sphi 0, %s65
    %s66 = sphi 0, %s63
    %s67 = sphi 0, %s66
    %s83 = sphi 0, %s67
    %s91 = sphi 0, %s93
    %s94 = sphi 0, %s91
    %s95 = sphi 0, %s94
    %s111 = sphi 0, %s95
    %s119 = sphi 0, %s121
    %s122 = sphi 0, %s119
    %s123 = sphi 0, %s122
    %s139 = sphi 0, %s123
    %s147 = sphi 0, %s149
    %s150 = sphi 0, %s147
    %s151 = sphi 0, %s150
    %s167 = sphi 0, %s151
  $region4: #{tpu_custom_call.1} parent=0 // loop_header_branch
    %14 = sbr.rel (%p12) target = $region8
  $region5: #{tpu_custom_call.1} parent=0 // loop_body
    %s16 = ssub.s32 %s11, 1
    %s17 = ssub.s32 %s11, 2
    %s24 = sadd.s32 1, %s19
    %p25 = scmp.ge.s32.totalorder %s24, 1
    %s26 = scalar_select %p25, 0, %s24
    %s27 = sadd.s32 1, %s18
    %s28 = scalar_select %p25, %s27, %s18
    %p29 = scmp.ge.s32.totalorder %s28, 2
    %s30 = scalar_select %p29, 0, %s28
    %s31 = ssub.s32 %s18, %s30
    %s32 = ssub.s32 %s19, %s26
    %s33 = sor.u32 %s31, %s32
    %p34 = scmp.eq.s32.totalorder %s33, 0
    %s36 = sadd.s32 %s35, 1
    %s37 = scalar_select %p34, %s35, %s36
    %p40 = pneg %p34
    %p41 = scmp.eq.s32.totalorder %s11, 1
    %p42 = por %p40, %p41
    %p43 = scmp.ne.s32.totalorder %s35, %s38
    %p44 = scmp.eq.s32.totalorder %s11, 0
    %p45 = por %p43, %p44
    %p46 = scmp.ne.s32.totalorder %s35, %s38
    %p47 = scmp.eq.s32.totalorder %s16, 1
    %p48 = por %p46, %p47
    %p49 = scmp.ne.s32.totalorder %s38, %s39
    %p50 = scmp.eq.s32.totalorder %s16, 0
    %p51 = por %p49, %p50
    %p52 = scmp.ne.s32.totalorder %s38, %s39
    %p53 = scmp.eq.s32.totalorder %s17, 1
    %p54 = por %p52, %p53
    %p56 = scmp.ne.s32.totalorder %s39, %s55
    %p57 = scmp.eq.s32.totalorder %s17, 0
    %p58 = por %p56, %p57
    %s59 = ssub.s32 %s18, %s30
    %s60 = ssub.s32 %s19, %s26
    %s61 = sor.u32 %s59, %s60
    %p62 = scmp.eq.s32.totalorder %s61, 0
    %s64 = sadd.s32 %s63, 1
    %s65 = scalar_select %p62, %s63, %s64
    %p68 = pneg %p62
    %p69 = scmp.eq.s32.totalorder %s11, 1
    %p70 = por %p68, %p69
    %p71 = scmp.ne.s32.totalorder %s63, %s66
    %p72 = scmp.eq.s32.totalorder %s11, 0
    %p73 = por %p71, %p72
    %p74 = scmp.ne.s32.totalorder %s63, %s66
    %p75 = scmp.eq.s32.totalorder %s16, 1
    %p76 = por %p74, %p75
    %p77 = scmp.ne.s32.totalorder %s66, %s67
    %p78 = scmp.eq.s32.totalorder %s16, 0
    %p79 = por %p77, %p78
    %p80 = scmp.ne.s32.totalorder %s66, %s67
    %p81 = scmp.eq.s32.totalorder %s17, 1
    %p82 = por %p80, %p81
    %p84 = scmp.ne.s32.totalorder %s67, %s83
    %p85 = scmp.eq.s32.totalorder %s17, 0
    %p86 = por %p84, %p85
    %s87 = ssub.s32 %s18, %s30
    %s88 = ssub.s32 %s19, %s26
    %s89 = sor.u32 %s87, %s88
    %p90 = scmp.eq.s32.totalorder %s89, 0
    %s92 = sadd.s32 %s91, 1
    %s93 = scalar_select %p90, %s91, %s92
    %p96 = pneg %p90
    %p97 = scmp.eq.s32.totalorder %s11, 1
    %p98 = por %p96, %p97
    %p99 = scmp.ne.s32.totalorder %s91, %s94
    %p100 = scmp.eq.s32.totalorder %s11, 0
    %p101 = por %p99, %p100
    %p102 = scmp.ne.s32.totalorder %s91, %s94
    %p103 = scmp.eq.s32.totalorder %s16, 1
    %p104 = por %p102, %p103
    %p105 = scmp.ne.s32.totalorder %s94, %s95
    %p106 = scmp.eq.s32.totalorder %s16, 0
    %p107 = por %p105, %p106
    %p108 = scmp.ne.s32.totalorder %s94, %s95
    %p109 = scmp.eq.s32.totalorder %s17, 1
    %p110 = por %p108, %p109
    %p112 = scmp.ne.s32.totalorder %s95, %s111
    %p113 = scmp.eq.s32.totalorder %s17, 0
    %p114 = por %p112, %p113
    %s115 = ssub.s32 %s18, %s30
    %s116 = ssub.s32 %s19, %s26
    %s117 = sor.u32 %s115, %s116
    %p118 = scmp.eq.s32.totalorder %s117, 0
    %s120 = sadd.s32 %s119, 1
    %s121 = scalar_select %p118, %s119, %s120
    %p124 = pneg %p118
    %p125 = scmp.eq.s32.totalorder %s11, 1
    %p126 = por %p124, %p125
    %p127 = scmp.ne.s32.totalorder %s119, %s122
    %p128 = scmp.eq.s32.totalorder %s11, 0
    %p129 = por %p127, %p128
    %p130 = scmp.ne.s32.totalorder %s119, %s122
    %p131 = scmp.eq.s32.totalorder %s16, 1
    %p132 = por %p130, %p131
    %p133 = scmp.ne.s32.totalorder %s122, %s123
    %p134 = scmp.eq.s32.totalorder %s16, 0
    %p135 = por %p133, %p134
    %p136 = scmp.ne.s32.totalorder %s122, %s123
    %p137 = scmp.eq.s32.totalorder %s17, 1
    %p138 = por %p136, %p137
    %p140 = scmp.ne.s32.totalorder %s123, %s139
    %p141 = scmp.eq.s32.totalorder %s17, 0
    %p142 = por %p140, %p141
    %s143 = ssub.s32 %s18, %s30
    %s144 = ssub.s32 %s19, %s26
    %s145 = sor.u32 %s143, %s144
    %p146 = scmp.eq.s32.totalorder %s145, 0
    %s148 = sadd.s32 %s147, 1
    %s149 = scalar_select %p146, %s147, %s148
    %p152 = pneg %p146
    %p153 = scmp.eq.s32.totalorder %s11, 1
    %p154 = por %p152, %p153
    %p155 = scmp.ne.s32.totalorder %s147, %s150
    %p156 = scmp.eq.s32.totalorder %s11, 0
    %p157 = por %p155, %p156
    %p158 = scmp.ne.s32.totalorder %s147, %s150
    %p159 = scmp.eq.s32.totalorder %s16, 1
    %p160 = por %p158, %p159
    %p161 = scmp.ne.s32.totalorder %s150, %s151
    %p162 = scmp.eq.s32.totalorder %s16, 0
    %p163 = por %p161, %p162
    %p164 = scmp.ne.s32.totalorder %s150, %s151
    %p165 = scmp.eq.s32.totalorder %s17, 1
    %p166 = por %p164, %p165
    %p168 = scmp.ne.s32.totalorder %s151, %s167
    %p169 = scmp.eq.s32.totalorder %s17, 0
    %p170 = por %p168, %p169
    %p171 = scmp.le.s32.totalorder 1, %s11
    %p172 = scmp.lt.s32.totalorder %s11, 3
    %p173 = pnand %p171, %p172
    %p174 = pneg %p173
    // Predicated region
    $region9: #{tpu_custom_call.1} parent=5 // pred_check
      _
    $region10: #{tpu_custom_call.1} parent=5 // pred_check_branch
      %176 = sbr.rel (%p173) target = $region12
    $region11: #{tpu_custom_call.1} parent=5 // pred_region
      %s177 = ssub.s32 %s11, 1
    $region12: #{tpu_custom_call.1} parent=5 // pred_fallthru
      _
    %p178 = scmp.lt.s32.totalorder %s11, 2
    // Predicated region
    $region13: #{tpu_custom_call.1} parent=5 // pred_check
      %p179 = pneg %p178
    $region14: #{tpu_custom_call.1} parent=5 // pred_check_branch
      %181 = sbr.rel (%p179) target = $region16
    $region15: #{tpu_custom_call.1} parent=5 // pred_region
      // Predicated region
      $region17: #{tpu_custom_call.1} parent=15 // pred_check
        %p182 = pneg %p45
      $region18: #{tpu_custom_call.1} parent=15 // pred_check_branch
        %184 = sbr.rel (%p182) target = $region20
      $region19: #{tpu_custom_call.1} parent=15 // pred_region
        %s185 = smul.u32 4, %s19
        %p186 = scmp.lt.s32.totalorder %s18, 1
        %s187 = scalar_select %p186, %s18, 1
        %p188 = scmp.lt.s32.totalorder %s185, 3
        %s189 = scalar_select %p188, %s185, 3
        %s190 = smul.addr %s189, 2
        %s191 = smul.addr %s187, 8
        %s192 = sadd.s32 %s190, %s191
        %s193 = smul.addr %s192, 8
        %s194 = scalar_lea.vmem %s0, %s193
        %s195 = smul.u32 4, %s19
      $region20: #{tpu_custom_call.1} parent=15 // pred_fallthru
        _
      // Predicated region
      $region21: #{tpu_custom_call.1} parent=15 // pred_check
        %p196 = pneg %p73
      $region22: #{tpu_custom_call.1} parent=15 // pred_check_branch
        %198 = sbr.rel (%p196) target = $region24
      $region23: #{tpu_custom_call.1} parent=15 // pred_region
        %s199 = smul.u32 4, %s19
        %p200 = scmp.lt.s32.totalorder %s18, 1
        %s201 = scalar_select %p200, %s18, 1
        %p202 = scmp.lt.s32.totalorder %s199, 3
        %s203 = scalar_select %p202, %s199, 3
        %s204 = smul.addr %s203, 2
        %s205 = smul.addr %s201, 8
        %s206 = sadd.s32 %s204, %s205
        %s207 = smul.addr %s206, 8
        %s208 = scalar_lea.vmem %s1, %s207
        %s209 = smul.u32 4, %s19
      $region24: #{tpu_custom_call.1} parent=15 // pred_fallthru
        _
      // Predicated region
      $region25: #{tpu_custom_call.1} parent=15 // pred_check
        %p210 = pneg %p101
      $region26: #{tpu_custom_call.1} parent=15 // pred_check_branch
        %212 = sbr.rel (%p210) target = $region28
      $region27: #{tpu_custom_call.1} parent=15 // pred_region
        %s213 = smul.u32 4, %s19
        %p214 = scmp.lt.s32.totalorder %s18, 1
        %s215 = scalar_select %p214, %s18, 1
        %p216 = scmp.lt.s32.totalorder %s213, 3
        %s217 = scalar_select %p216, %s213, 3
        %s218 = smul.addr %s217, 2
        %s219 = smul.addr %s215, 8
        %s220 = sadd.s32 %s218, %s219
        %s221 = smul.addr %s220, 8
        %s222 = scalar_lea.vmem %s2, %s221
        %s223 = smul.u32 4, %s19
      $region28: #{tpu_custom_call.1} parent=15 // pred_fallthru
        _
    $region16: #{tpu_custom_call.1} parent=5 // pred_fallthru
      _
    %p224 = scmp.le.s32.totalorder 1, %s11
    %p225 = scmp.lt.s32.totalorder %s11, 3
    %p226 = pnand %p224, %p225
    %p227 = pneg %p226
    // Predicated region
    $region29: #{tpu_custom_call.1} parent=5 // pred_check
      _
    $region30: #{tpu_custom_call.1} parent=5 // pred_check_branch
      %229 = sbr.rel (%p226) target = $region32
    $region31: #{tpu_custom_call.1} parent=5 // pred_region
      %s230 = ssub.s32 %s11, 1
      %s231 = smul.u32 4, %s21
      %p232 = scmp.lt.s32.totalorder %s20, 1
      %s233 = scalar_select %p232, %s20, 1
      %p234 = scmp.lt.s32.totalorder %s231, 3
      %s235 = scalar_select %p234, %s231, 3
      %s236 = smul.addr %s235, 2
      %s237 = smul.addr %s233, 8
      %s238 = sadd.s32 %s236, %s237
      %s239 = smul.addr %s238, 8
      %s240 = scalar_lea.vmem %s0, %s239
      %p241 = pneg %p51
      %p242 = pneg %p48
      %s243 = smul.u32 4, %s21
      %p244 = scmp.lt.s32.totalorder %s20, 1
      %s245 = scalar_select %p244, %s20, 1
      %p246 = scmp.lt.s32.totalorder %s243, 3
      %s247 = scalar_select %p246, %s243, 3
      %s248 = smul.addr %s247, 2
      %s249 = smul.addr %s245, 8
      %s250 = sadd.s32 %s248, %s249
      %s251 = smul.addr %s250, 8
      %s252 = scalar_lea.vmem %s1, %s251
      %p253 = pneg %p79
      %p254 = pneg %p76
      %s255 = smul.u32 4, %s21
      %p256 = scmp.lt.s32.totalorder %s20, 1
      %s257 = scalar_select %p256, %s20, 1
      %p258 = scmp.lt.s32.totalorder %s255, 3
      %s259 = scalar_select %p258, %s255, 3
      %s260 = smul.addr %s259, 2
      %s261 = smul.addr %s257, 8
      %s262 = sadd.s32 %s260, %s261
      %s263 = smul.addr %s262, 8
      %s264 = scalar_lea.vmem %s2, %s263
      %p265 = pneg %p107
      %p266 = pneg %p104
      %p267 = pneg %p135
      %p268 = pneg %p132
      %s269 = smul.u32 4, %s21
      %p270 = scmp.lt.s32.totalorder %s20, 1
      %s271 = scalar_select %p270, %s20, 1
      %p272 = scmp.lt.s32.totalorder %s269, 3
      %s273 = scalar_select %p272, %s269, 3
      %s274 = smul.addr %s273, 2
      %s275 = smul.addr %s271, 8
      %s276 = sadd.s32 %s274, %s275
      %s277 = smul.addr %s276, 8
      %s278 = scalar_lea.vmem %s3, %s277
      %p279 = pneg %p163
      %p280 = pneg %p160
      %s281 = smul.u32 4, %s21
      %p282 = scmp.lt.s32.totalorder %s20, 1
      %s283 = scalar_select %p282, %s20, 1
      %p284 = scmp.lt.s32.totalorder %s281, 3
      %s285 = scalar_select %p284, %s281, 3
      %s286 = smul.addr %s285, 2
      %s287 = smul.addr %s283, 8
      %s288 = sadd.s32 %s286, %s287
      %s289 = smul.addr %s288, 8
      %s290 = scalar_lea.vmem %s4, %s289
      %s291 = smul.u32 4, %s21
      %p292 = scmp.lt.s32.totalorder %s20, 1
      %s293 = scalar_select %p292, %s20, 1
      %p294 = scmp.lt.s32.totalorder %s291, 3
      %s295 = scalar_select %p294, %s291, 3
      %s296 = smul.addr %s295, 2
      %s297 = smul.addr %s293, 8
      %s298 = sadd.s32 %s296, %s297
      %s299 = smul.addr %s298, 8
      %s300 = scalar_lea.vmem %s0, %s299
      %s301 = smul.u32 4, %s21
      %s302 = smul.u32 4, %s21
      %p303 = scmp.lt.s32.totalorder %s20, 1
      %s304 = scalar_select %p303, %s20, 1
      %p305 = scmp.lt.s32.totalorder %s302, 3
      %s306 = scalar_select %p305, %s302, 3
      %s307 = smul.addr %s306, 2
      %s308 = smul.addr %s304, 8
      %s309 = sadd.s32 %s307, %s308
      %s310 = smul.addr %s309, 8
      %s311 = scalar_lea.vmem %s1, %s310
      %s312 = smul.u32 4, %s21
      %s313 = smul.u32 4, %s21
      %p314 = scmp.lt.s32.totalorder %s20, 1
      %s315 = scalar_select %p314, %s20, 1
      %p316 = scmp.lt.s32.totalorder %s313, 3
      %s317 = scalar_select %p316, %s313, 3
      %s318 = smul.addr %s317, 2
      %s319 = smul.addr %s315, 8
      %s320 = sadd.s32 %s318, %s319
      %s321 = smul.addr %s320, 8
      %s322 = scalar_lea.vmem %s2, %s321
      %s323 = smul.u32 4, %s21
      %s324 = smul.u32 4, %s21
      %p325 = scmp.lt.s32.totalorder %s20, 1
      %s326 = scalar_select %p325, %s20, 1
      %p327 = scmp.lt.s32.totalorder %s324, 3
      %s328 = scalar_select %p327, %s324, 3
      %s329 = smul.addr %s328, 2
      %s330 = smul.addr %s326, 8
      %s331 = sadd.s32 %s329, %s330
      %s332 = smul.addr %s331, 8
      %s333 = scalar_lea.vmem %s3, %s332
      %s334 = smul.u32 4, %s21
      %s335 = smul.u32 4, %s21
      %p336 = scmp.lt.s32.totalorder %s20, 1
      %s337 = scalar_select %p336, %s20, 1
      %p338 = scmp.lt.s32.totalorder %s335, 3
      %s339 = scalar_select %p338, %s335, 3
      %s340 = smul.addr %s339, 2
      %s341 = smul.addr %s337, 8
      %s342 = sadd.s32 %s340, %s341
      %s343 = smul.addr %s342, 8
      %s344 = scalar_lea.vmem %s4, %s343
      %s345 = smul.u32 4, %s21
      %v346 = vld [vmem:[%s300] sm:$0xff]
      %v347 = vld [vmem:[%s300 + $0x8] sm:$0x3]
      %v348 = vld [vmem:[%s300 + $0x10] sm:$0xff]
      %v349 = vld [vmem:[%s300 + $0x18] sm:$0x3]
      %v350 = vld [vmem:[%s300 + $0x20] sm:$0xff]
      %v351 = vld [vmem:[%s300 + $0x28] sm:$0x3]
      %v352 = vld [vmem:[%s300 + $0x30] sm:$0xff]
      %v353 = vld [vmem:[%s300 + $0x38] sm:$0x3]
      %v354 = vmul.f32 %v346, 0.35355338
      %v355 = vmul.f32 %v347, 0.35355338
      %v356 = vmul.f32 %v348, 0.35355338
      %v357 = vmul.f32 %v349, 0.35355338
      %v358 = vmul.f32 %v350, 0.35355338
      %v359 = vmul.f32 %v351, 0.35355338
      %v360 = vmul.f32 %v352, 0.35355338
      %v361 = vmul.f32 %v353, 0.35355338
      %v362 = vld [vmem:[%s311] sm:$0xff]
      %v363 = vld [vmem:[%s311 + $0x8] sm:$0x3]
      %v364 = vld [vmem:[%s311 + $0x10] sm:$0xff]
      %v365 = vld [vmem:[%s311 + $0x18] sm:$0x3]
      %v366 = vld [vmem:[%s311 + $0x20] sm:$0xff]
      %v367 = vld [vmem:[%s311 + $0x28] sm:$0x3]
      %v368 = vld [vmem:[%s311 + $0x30] sm:$0xff]
      %v369 = vld [vmem:[%s311 + $0x38] sm:$0x3]
      %v370 = vld [vmem:[%s322] sm:$0xff]
      %v371 = vld [vmem:[%s322 + $0x8] sm:$0x3]
      %v372 = vld [vmem:[%s322 + $0x10] sm:$0xff]
      %v373 = vld [vmem:[%s322 + $0x18] sm:$0x3]
      %v374 = vld [vmem:[%s322 + $0x20] sm:$0xff]
      %v375 = vld [vmem:[%s322 + $0x28] sm:$0x3]
      %v376 = vld [vmem:[%s322 + $0x30] sm:$0xff]
      %v377 = vld [vmem:[%s322 + $0x38] sm:$0x3]
      %vm378 = vcmask 64512
      %v380 = vsel %vm378, %v354, 0
      %v383 = vsel %vm378, %v355, 0
      %v386 = vsel %vm378, %v362, 0
      %v389 = vsel %vm378, %v363, 0
      %391 = vmatpush.xpose.msra.mxu0 0.0
      %392 = vmatpush.xpose.msra.mxu0 0.0
      %393 = vmatpush.xpose.msra.mxu0 0.0
      %394 = vmatpush.xpose.msra.mxu0 0.0
      %395 = vmatpush.xpose.msra.mxu0 0.0
      %396 = vmatpush.xpose.msra.mxu0 0.0
      %397 = vmatpush.xpose.msra.mxu0 0.0
      %398 = vmatpush.xpose.msra.mxu0 0.0
      %399 = vmatpush.xpose.msra.mxu0 0.0
      %400 = vmatpush.xpose.msra.mxu0 0.0
      %401 = vmatpush.xpose.msra.mxu0 0.0
      %402 = vmatpush.xpose.msra.mxu0 0.0
      %403 = vmatpush.xpose.msra.mxu0 0.0
      %404 = vmatpush.xpose.msra.mxu0 0.0
      %405 = vmatpush.xpose.msra.mxu0 %v389
      %406 = vmatpush.xpose.msra.mxu0 %v386
      %407 = vmatmul.f32.gmra.mxu0 %v380
      %v408 = vpop.f32.mrf.mxu0
      %v409 = vadd.f32 0.0, %v408
      %410 = vmatmul.f32.gmra.mxu0 %v383
      %v411 = vpop.f32.mrf.mxu0
      %v412 = vadd.f32 0.0, %v411
      %413 = vdwg.mxu0
      %v415 = vsel %vm378, %v356, 0
      %v418 = vsel %vm378, %v357, 0
      %v421 = vsel %vm378, %v364, 0
      %v424 = vsel %vm378, %v365, 0
      %426 = vmatpush.xpose.msra.mxu0 0.0
      %427 = vmatpush.xpose.msra.mxu0 0.0
      %428 = vmatpush.xpose.msra.mxu0 0.0
      %429 = vmatpush.xpose.msra.mxu0 0.0
      %430 = vmatpush.xpose.msra.mxu0 0.0
      %431 = vmatpush.xpose.msra.mxu0 0.0
      %432 = vmatpush.xpose.msra.mxu0 0.0
      %433 = vmatpush.xpose.msra.mxu0 0.0
      %434 = vmatpush.xpose.msra.mxu0 0.0
      %435 = vmatpush.xpose.msra.mxu0 0.0
      %436 = vmatpush.xpose.msra.mxu0 0.0
      %437 = vmatpush.xpose.msra.mxu0 0.0
      %438 = vmatpush.xpose.msra.mxu0 0.0
      %439 = vmatpush.xpose.msra.mxu0 0.0
      %440 = vmatpush.xpose.msra.mxu0 %v424
      %441 = vmatpush.xpose.msra.mxu0 %v421
      %442 = vmatmul.f32.gmra.mxu0 %v415
      %v443 = vpop.f32.mrf.mxu0
      %v444 = vadd.f32 0.0, %v443
      %445 = vmatmul.f32.gmra.mxu0 %v418
      %v446 = vpop.f32.mrf.mxu0
      %v447 = vadd.f32 0.0, %v446
      %448 = vdwg.mxu0
      %v450 = vsel %vm378, %v358, 0
      %v453 = vsel %vm378, %v359, 0
      %v456 = vsel %vm378, %v366, 0
      %v459 = vsel %vm378, %v367, 0
      %461 = vmatpush.xpose.msra.mxu0 0.0
      %462 = vmatpush.xpose.msra.mxu0 0.0
      %463 = vmatpush.xpose.msra.mxu0 0.0
      %464 = vmatpush.xpose.msra.mxu0 0.0
      %465 = vmatpush.xpose.msra.mxu0 0.0
      %466 = vmatpush.xpose.msra.mxu0 0.0
      %467 = vmatpush.xpose.msra.mxu0 0.0
      %468 = vmatpush.xpose.msra.mxu0 0.0
      %469 = vmatpush.xpose.msra.mxu0 0.0
      %470 = vmatpush.xpose.msra.mxu0 0.0
      %471 = vmatpush.xpose.msra.mxu0 0.0
      %472 = vmatpush.xpose.msra.mxu0 0.0
      %473 = vmatpush.xpose.msra.mxu0 0.0
      %474 = vmatpush.xpose.msra.mxu0 0.0
      %475 = vmatpush.xpose.msra.mxu0 %v459
      %476 = vmatpush.xpose.msra.mxu0 %v456
      %477 = vmatmul.f32.gmra.mxu0 %v450
      %v478 = vpop.f32.mrf.mxu0
      %v479 = vadd.f32 0.0, %v478
      %480 = vmatmul.f32.gmra.mxu0 %v453
      %v481 = vpop.f32.mrf.mxu0
      %v482 = vadd.f32 0.0, %v481
      %483 = vdwg.mxu0
      %v485 = vsel %vm378, %v360, 0
      %v488 = vsel %vm378, %v361, 0
      %v491 = vsel %vm378, %v368, 0
      %v494 = vsel %vm378, %v369, 0
      %496 = vmatpush.xpose.msra.mxu0 0.0
      %497 = vmatpush.xpose.msra.mxu0 0.0
      %498 = vmatpush.xpose.msra.mxu0 0.0
      %499 = vmatpush.xpose.msra.mxu0 0.0
      %500 = vmatpush.xpose.msra.mxu0 0.0
      %501 = vmatpush.xpose.msra.mxu0 0.0
      %502 = vmatpush.xpose.msra.mxu0 0.0
      %503 = vmatpush.xpose.msra.mxu0 0.0
      %504 = vmatpush.xpose.msra.mxu0 0.0
      %505 = vmatpush.xpose.msra.mxu0 0.0
      %506 = vmatpush.xpose.msra.mxu0 0.0
      %507 = vmatpush.xpose.msra.mxu0 0.0
      %508 = vmatpush.xpose.msra.mxu0 0.0
      %509 = vmatpush.xpose.msra.mxu0 0.0
      %510 = vmatpush.xpose.msra.mxu0 %v494
      %511 = vmatpush.xpose.msra.mxu0 %v491
      %512 = vmatmul.f32.gmra.mxu0 %v485
      %v513 = vpop.f32.mrf.mxu0
      %v514 = vadd.f32 0.0, %v513
      %515 = vmatmul.f32.gmra.mxu0 %v488
      %v516 = vpop.f32.mrf.mxu0
      %v517 = vadd.f32 0.0, %v516
      %518 = vdwg.mxu0
      %vm519 = vcmask 80896
      %v520 = vsel %vm519, %v409, -inf
      %521 = vmax.xlane.f32.xlu0 %v520
      %v522 = vpop.xlane.xlu0 %521
      %vm523 = vcmask 74752
      %v524 = vsel %vm523, %v412, -inf
      %525 = vmax.xlane.f32.xlu0 %v524
      %v526 = vpop.xlane.xlu0 %525
      %v527 = vsel %vm519, %v444, -inf
      %528 = vmax.xlane.f32.xlu0 %v527
      %v529 = vpop.xlane.xlu0 %528
      %v530 = vsel %vm523, %v447, -inf
      %531 = vmax.xlane.f32.xlu0 %v530
      %v532 = vpop.xlane.xlu0 %531
      %v533 = vsel %vm519, %v479, -inf
      %534 = vmax.xlane.f32.xlu0 %v533
      %v535 = vpop.xlane.xlu0 %534
      %v536 = vsel %vm523, %v482, -inf
      %537 = vmax.xlane.f32.xlu0 %v536
      %v538 = vpop.xlane.xlu0 %537
      %v539 = vsel %vm519, %v514, -inf
      %540 = vmax.xlane.f32.xlu0 %v539
      %v541 = vpop.xlane.xlu0 %540
      %v542 = vsel %vm523, %v517, -inf
      %543 = vmax.xlane.f32.xlu0 %v542
      %v544 = vpop.xlane.xlu0 %543
      %v545 = vsub.f32 %v409, %v522
      %v546 = vsub.f32 %v412, %v526
      %v547 = vsub.f32 %v444, %v529
      %v548 = vsub.f32 %v447, %v532
      %v549 = vsub.f32 %v479, %v535
      %v550 = vsub.f32 %v482, %v538
      %v551 = vsub.f32 %v514, %v541
      %v552 = vsub.f32 %v517, %v544
      %v553 = vmul.f32 %v545, 1.442695
      %v554 = vpow.pop %v553
      %v555 = vmul.f32 %v546, 1.442695
      %v556 = vpow.pop %v555
      %v557 = vmul.f32 %v547, 1.442695
      %v558 = vpow.pop %v557
      %v559 = vmul.f32 %v548, 1.442695
      %v560 = vpow.pop %v559
      %v561 = vmul.f32 %v549, 1.442695
      %v562 = vpow.pop %v561
      %v563 = vmul.f32 %v550, 1.442695
      %v564 = vpow.pop %v563
      %v565 = vmul.f32 %v551, 1.442695
      %v566 = vpow.pop %v565
      %v567 = vmul.f32 %v552, 1.442695
      %v568 = vpow.pop %v567
      %v569 = vsel %vm519, %v554, 0.0
      %570 = vadd.xlane.f32.xlu0 %v569
      %v571 = vpop.xlane.xlu0 %570
      %v572 = vsel %vm523, %v556, 0.0
      %573 = vadd.xlane.f32.xlu0 %v572
      %v574 = vpop.xlane.xlu0 %573
      %v575 = vsel %vm519, %v558, 0.0
      %576 = vadd.xlane.f32.xlu0 %v575
      %v577 = vpop.xlane.xlu0 %576
      %v578 = vsel %vm523, %v560, 0.0
      %579 = vadd.xlane.f32.xlu0 %v578
      %v580 = vpop.xlane.xlu0 %579
      %v581 = vsel %vm519, %v562, 0.0
      %582 = vadd.xlane.f32.xlu0 %v581
      %v583 = vpop.xlane.xlu0 %582
      %v584 = vsel %vm523, %v564, 0.0
      %585 = vadd.xlane.f32.xlu0 %v584
      %v586 = vpop.xlane.xlu0 %585
      %v587 = vsel %vm519, %v566, 0.0
      %588 = vadd.xlane.f32.xlu0 %v587
      %v589 = vpop.xlane.xlu0 %588
      %v590 = vsel %vm523, %v568, 0.0
      %591 = vadd.xlane.f32.xlu0 %v590
      %v592 = vpop.xlane.xlu0 %591
      %v593 = vrcp.pop %v571
      %v594 = vmul.f32 %v571, %v593
      %v595 = vsub.f32 1.0, %v594
      %v596 = vmul.f32 %v593, %v595
      %v597 = vadd.f32 %v593, %v596
      %vm598 = vweird.f32 %v571
      %vm599 = vweird.f32 %v593
      %vm600 = vmor %vm598, %vm599
      %v601 = vsel %vm600, %v593, %v597
      %v602 = vand.u32 2147483647, %v571
      %vm603 = vcmp.eq.f32.partialorder %v602, 8.507059e+37
      %v604 = vand.u32 %v571, 2147483648
      %v605 = vor.u32 1.1754944e-38, %v604
      %v606 = vsel %vm603, %v605, %v601
      %v607 = vrcp.pop %v574
      %v608 = vmul.f32 %v574, %v607
      %v609 = vsub.f32 1.0, %v608
      %v610 = vmul.f32 %v607, %v609
      %v611 = vadd.f32 %v607, %v610
      %vm612 = vweird.f32 %v574
      %vm613 = vweird.f32 %v607
      %vm614 = vmor %vm612, %vm613
      %v615 = vsel %vm614, %v607, %v611
      %v616 = vand.u32 2147483647, %v574
      %vm617 = vcmp.eq.f32.partialorder %v616, 8.507059e+37
      %v618 = vand.u32 %v574, 2147483648
      %v619 = vor.u32 1.1754944e-38, %v618
      %v620 = vsel %vm617, %v619, %v615
      %v621 = vrcp.pop %v577
      %v622 = vmul.f32 %v577, %v621
      %v623 = vsub.f32 1.0, %v622
      %v624 = vmul.f32 %v621, %v623
      %v625 = vadd.f32 %v621, %v624
      %vm626 = vweird.f32 %v577
      %vm627 = vweird.f32 %v621
      %vm628 = vmor %vm626, %vm627
      %v629 = vsel %vm628, %v621, %v625
      %v630 = vand.u32 2147483647, %v577
      %vm631 = vcmp.eq.f32.partialorder %v630, 8.507059e+37
      %v632 = vand.u32 %v577, 2147483648
      %v633 = vor.u32 1.1754944e-38, %v632
      %v634 = vsel %vm631, %v633, %v629
      %v635 = vrcp.pop %v580
      %v636 = vmul.f32 %v580, %v635
      %v637 = vsub.f32 1.0, %v636
      %v638 = vmul.f32 %v635, %v637
      %v639 = vadd.f32 %v635, %v638
      %vm640 = vweird.f32 %v580
      %vm641 = vweird.f32 %v635
      %vm642 = vmor %vm640, %vm641
      %v643 = vsel %vm642, %v635, %v639
      %v644 = vand.u32 2147483647, %v580
      %vm645 = vcmp.eq.f32.partialorder %v644, 8.507059e+37
      %v646 = vand.u32 %v580, 2147483648
      %v647 = vor.u32 1.1754944e-38, %v646
      %v648 = vsel %vm645, %v647, %v643
      %v649 = vrcp.pop %v583
      %v650 = vmul.f32 %v583, %v649
      %v651 = vsub.f32 1.0, %v650
      %v652 = vmul.f32 %v649, %v651
      %v653 = vadd.f32 %v649, %v652
      %vm654 = vweird.f32 %v583
      %vm655 = vweird.f32 %v649
      %vm656 = vmor %vm654, %vm655
      %v657 = vsel %vm656, %v649, %v653
      %v658 = vand.u32 2147483647, %v583
      %vm659 = vcmp.eq.f32.partialorder %v658, 8.507059e+37
      %v660 = vand.u32 %v583, 2147483648
      %v661 = vor.u32 1.1754944e-38, %v660
      %v662 = vsel %vm659, %v661, %v657
      %v663 = vrcp.pop %v586
      %v664 = vmul.f32 %v586, %v663
      %v665 = vsub.f32 1.0, %v664
      %v666 = vmul.f32 %v663, %v665
      %v667 = vadd.f32 %v663, %v666
      %vm668 = vweird.f32 %v586
      %vm669 = vweird.f32 %v663
      %vm670 = vmor %vm668, %vm669
      %v671 = vsel %vm670, %v663, %v667
      %v672 = vand.u32 2147483647, %v586
      %vm673 = vcmp.eq.f32.partialorder %v672, 8.507059e+37
      %v674 = vand.u32 %v586, 2147483648
      %v675 = vor.u32 1.1754944e-38, %v674
      %v676 = vsel %vm673, %v675, %v671
      %v677 = vrcp.pop %v589
      %v678 = vmul.f32 %v589, %v677
      %v679 = vsub.f32 1.0, %v678
      %v680 = vmul.f32 %v677, %v679
      %v681 = vadd.f32 %v677, %v680
      %vm682 = vweird.f32 %v589
      %vm683 = vweird.f32 %v677
      %vm684 = vmor %vm682, %vm683
      %v685 = vsel %vm684, %v677, %v681
      %v686 = vand.u32 2147483647, %v589
      %vm687 = vcmp.eq.f32.partialorder %v686, 8.507059e+37
      %v688 = vand.u32 %v589, 2147483648
      %v689 = vor.u32 1.1754944e-38, %v688
      %v690 = vsel %vm687, %v689, %v685
      %v691 = vrcp.pop %v592
      %v692 = vmul.f32 %v592, %v691
      %v693 = vsub.f32 1.0, %v692
      %v694 = vmul.f32 %v691, %v693
      %v695 = vadd.f32 %v691, %v694
      %vm696 = vweird.f32 %v592
      %vm697 = vweird.f32 %v691
      %vm698 = vmor %vm696, %vm697
      %v699 = vsel %vm698, %v691, %v695
      %v700 = vand.u32 2147483647, %v592
      %vm701 = vcmp.eq.f32.partialorder %v700, 8.507059e+37
      %v702 = vand.u32 %v592, 2147483648
      %v703 = vor.u32 1.1754944e-38, %v702
      %v704 = vsel %vm701, %v703, %v699
      %v705 = vmul.f32 %v554, %v606
      %v706 = vmul.f32 %v556, %v620
      %v707 = vmul.f32 %v558, %v634
      %v708 = vmul.f32 %v560, %v648
      %v709 = vmul.f32 %v562, %v662
      %v710 = vmul.f32 %v564, %v676
      %v711 = vmul.f32 %v566, %v690
      %v712 = vmul.f32 %v568, %v704
      %v714 = vsel %vm519, %v705, 0
      %v717 = vsel %vm519, %v706, 0
      %vm719 = vcmask 1041408
      %v721 = vsel %vm719, %v371, 0
      %723 = vmatpush.msra.mxu0 0.0
      %724 = vmatpush.msra.mxu0 0.0
      %725 = vmatpush.msra.mxu0 0.0
      %726 = vmatpush.msra.mxu0 0.0
      %727 = vmatpush.msra.mxu0 0.0
      %728 = vmatpush.msra.mxu0 0.0
      %729 = vmatpush.msra.mxu0 0.0
      %730 = vmatpush.msra.mxu0 0.0
      %731 = vmatpush.msra.mxu0 0.0
      %732 = vmatpush.msra.mxu0 0.0
      %733 = vmatpush.msra.mxu0 0.0
      %734 = vmatpush.msra.mxu0 0.0
      %735 = vmatpush.msra.mxu0 0.0
      %736 = vmatpush.msra.mxu0 0.0
      %737 = vmatpush.msra.mxu0 %v721
      %738 = vmatpush.msra.mxu0 %v370
      %739 = vmatmul.f32.gmra.mxu0 %v714
      %v740 = vpop.f32.mrf.mxu0
      %v741 = vadd.f32 0.0, %v740
      %742 = vmatmul.f32.gmra.mxu0 %v717
      %v743 = vpop.f32.mrf.mxu0
      %v744 = vadd.f32 0.0, %v743
      %745 = vdwg.mxu0
      %v747 = vsel %vm519, %v707, 0
      %v750 = vsel %vm519, %v708, 0
      %v753 = vsel %vm719, %v373, 0
      %755 = vmatpush.msra.mxu0 0.0
      %756 = vmatpush.msra.mxu0 0.0
      %757 = vmatpush.msra.mxu0 0.0
      %758 = vmatpush.msra.mxu0 0.0
      %759 = vmatpush.msra.mxu0 0.0
      %760 = vmatpush.msra.mxu0 0.0
      %761 = vmatpush.msra.mxu0 0.0
      %762 = vmatpush.msra.mxu0 0.0
      %763 = vmatpush.msra.mxu0 0.0
      %764 = vmatpush.msra.mxu0 0.0
      %765 = vmatpush.msra.mxu0 0.0
      %766 = vmatpush.msra.mxu0 0.0
      %767 = vmatpush.msra.mxu0 0.0
      %768 = vmatpush.msra.mxu0 0.0
      %769 = vmatpush.msra.mxu0 %v753
      %770 = vmatpush.msra.mxu0 %v372
      %771 = vmatmul.f32.gmra.mxu0 %v747
      %v772 = vpop.f32.mrf.mxu0
      %v773 = vadd.f32 0.0, %v772
      %774 = vmatmul.f32.gmra.mxu0 %v750
      %v775 = vpop.f32.mrf.mxu0
      %v776 = vadd.f32 0.0, %v775
      %777 = vdwg.mxu0
      %v779 = vsel %vm519, %v709, 0
      %v782 = vsel %vm519, %v710, 0
      %v785 = vsel %vm719, %v375, 0
      %787 = vmatpush.msra.mxu0 0.0
      %788 = vmatpush.msra.mxu0 0.0
      %789 = vmatpush.msra.mxu0 0.0
      %790 = vmatpush.msra.mxu0 0.0
      %791 = vmatpush.msra.mxu0 0.0
      %792 = vmatpush.msra.mxu0 0.0
      %793 = vmatpush.msra.mxu0 0.0
      %794 = vmatpush.msra.mxu0 0.0
      %795 = vmatpush.msra.mxu0 0.0
      %796 = vmatpush.msra.mxu0 0.0
      %797 = vmatpush.msra.mxu0 0.0
      %798 = vmatpush.msra.mxu0 0.0
      %799 = vmatpush.msra.mxu0 0.0
      %800 = vmatpush.msra.mxu0 0.0
      %801 = vmatpush.msra.mxu0 %v785
      %802 = vmatpush.msra.mxu0 %v374
      %803 = vmatmul.f32.gmra.mxu0 %v779
      %v804 = vpop.f32.mrf.mxu0
      %v805 = vadd.f32 0.0, %v804
      %806 = vmatmul.f32.gmra.mxu0 %v782
      %v807 = vpop.f32.mrf.mxu0
      %v808 = vadd.f32 0.0, %v807
      %809 = vdwg.mxu0
      %v811 = vsel %vm519, %v711, 0
      %v814 = vsel %vm519, %v712, 0
      %v817 = vsel %vm719, %v377, 0
      %819 = vmatpush.msra.mxu0 0.0
      %820 = vmatpush.msra.mxu0 0.0
      %821 = vmatpush.msra.mxu0 0.0
      %822 = vmatpush.msra.mxu0 0.0
      %823 = vmatpush.msra.mxu0 0.0
      %824 = vmatpush.msra.mxu0 0.0
      %825 = vmatpush.msra.mxu0 0.0
      %826 = vmatpush.msra.mxu0 0.0
      %827 = vmatpush.msra.mxu0 0.0
      %828 = vmatpush.msra.mxu0 0.0
      %829 = vmatpush.msra.mxu0 0.0
      %830 = vmatpush.msra.mxu0 0.0
      %831 = vmatpush.msra.mxu0 0.0
      %832 = vmatpush.msra.mxu0 0.0
      %833 = vmatpush.msra.mxu0 %v817
      %834 = vmatpush.msra.mxu0 %v376
      %835 = vmatmul.f32.gmra.mxu0 %v811
      %v836 = vpop.f32.mrf.mxu0
      %v837 = vadd.f32 0.0, %v836
      %838 = vmatmul.f32.gmra.mxu0 %v814
      %v839 = vpop.f32.mrf.mxu0
      %v840 = vadd.f32 0.0, %v839
      %841 = vdwg.mxu0
      %842 = vst.msk [vmem:[%s344] sm:$0xff] %vm519, %v705
      %843 = vst.msk [vmem:[%s344 + $0x8] sm:$0x3] %vm523, %v706
      %844 = vst.msk [vmem:[%s344 + $0x10] sm:$0xff] %vm519, %v707
      %845 = vst.msk [vmem:[%s344 + $0x18] sm:$0x3] %vm523, %v708
      %846 = vst.msk [vmem:[%s344 + $0x20] sm:$0xff] %vm519, %v709
      %847 = vst.msk [vmem:[%s344 + $0x28] sm:$0x3] %vm523, %v710
      %848 = vst.msk [vmem:[%s344 + $0x30] sm:$0xff] %vm519, %v711
      %849 = vst.msk [vmem:[%s344 + $0x38] sm:$0x3] %vm523, %v712
      %850 = vst.msk [vmem:[%s333] sm:$0xff] %vm378, %v741
      %vm851 = vcmask 58368
      %852 = vst.msk [vmem:[%s333 + $0x8] sm:$0x3] %vm851, %v744
      %853 = vst.msk [vmem:[%s333 + $0x10] sm:$0xff] %vm378, %v773
      %854 = vst.msk [vmem:[%s333 + $0x18] sm:$0x3] %vm851, %v776
      %855 = vst.msk [vmem:[%s333 + $0x20] sm:$0xff] %vm378, %v805
      %856 = vst.msk [vmem:[%s333 + $0x28] sm:$0x3] %vm851, %v808
      %857 = vst.msk [vmem:[%s333 + $0x30] sm:$0xff] %vm378, %v837
      %858 = vst.msk [vmem:[%s333 + $0x38] sm:$0x3] %vm851, %v840
      %s859 = smul.u32 4, %s21
      %p860 = scmp.lt.s32.totalorder %s20, 1
      %s861 = scalar_select %p860, %s20, 1
      %p862 = scmp.lt.s32.totalorder %s859, 3
      %s863 = scalar_select %p862, %s859, 3
      %s864 = smul.addr %s863, 2
      %s865 = smul.addr %s861, 8
      %s866 = sadd.s32 %s864, %s865
      %s867 = smul.addr %s866, 8
      %s868 = scalar_lea.vmem %s3, %s867
      %s869 = smul.u32 4, %s21
      %p870 = scmp.lt.s32.totalorder %s20, 1
      %s871 = scalar_select %p870, %s20, 1
      %p872 = scmp.lt.s32.totalorder %s869, 3
      %s873 = scalar_select %p872, %s869, 3
      %s874 = smul.addr %s873, 2
      %s875 = smul.addr %s871, 8
      %s876 = sadd.s32 %s874, %s875
      %s877 = smul.addr %s876, 8
      %s878 = scalar_lea.vmem %s4, %s877
      // Predicated region
      $region33: #{tpu_custom_call.1} parent=31 // pred_check
        %p879 = pneg %p132
      $region34: #{tpu_custom_call.1} parent=31 // pred_check_branch
        %881 = sbr.rel (%p879) target = $region36
      $region35: #{tpu_custom_call.1} parent=31 // pred_region
        %s882 = smul.u32 4, %s21
      $region36: #{tpu_custom_call.1} parent=31 // pred_fallthru
        _
      // Predicated region
      $region37: #{tpu_custom_call.1} parent=31 // pred_check
        %p883 = pneg %p160
      $region38: #{tpu_custom_call.1} parent=31 // pred_check_branch
        %885 = sbr.rel (%p883) target = $region40
      $region39: #{tpu_custom_call.1} parent=31 // pred_region
        %s886 = smul.u32 4, %s21
      $region40: #{tpu_custom_call.1} parent=31 // pred_fallthru
        _
    $region32: #{tpu_custom_call.1} parent=5 // pred_fallthru
      _
    %p887 = scmp.le.s32.totalorder 2, %s11
    // Predicated region
    $region41: #{tpu_custom_call.1} parent=5 // pred_check
      %p888 = pneg %p887
    $region42: #{tpu_custom_call.1} parent=5 // pred_check_branch
      %890 = sbr.rel (%p888) target = $region44
    $region43: #{tpu_custom_call.1} parent=5 // pred_region
      %s891 = ssub.s32 %s11, 2
      // Predicated region
      $region45: #{tpu_custom_call.1} parent=43 // pred_check
        %p892 = pneg %p138
      $region46: #{tpu_custom_call.1} parent=43 // pred_check_branch
        %894 = sbr.rel (%p892) target = $region48
      $region47: #{tpu_custom_call.1} parent=43 // pred_region
        %s895 = smul.u32 4, %s23
        %p896 = scmp.lt.s32.totalorder %s22, 1
        %s897 = scalar_select %p896, %s22, 1
        %p898 = scmp.lt.s32.totalorder %s895, 3
        %s899 = scalar_select %p898, %s895, 3
        %s900 = smul.addr %s899, 2
        %s901 = smul.addr %s897, 8
        %s902 = sadd.s32 %s900, %s901
        %s903 = smul.addr %s902, 8
        %s904 = scalar_lea.vmem %s3, %s903
      $region48: #{tpu_custom_call.1} parent=43 // pred_fallthru
        _
      // Predicated region
      $region49: #{tpu_custom_call.1} parent=43 // pred_check
        %p905 = pneg %p166
      $region50: #{tpu_custom_call.1} parent=43 // pred_check_branch
        %907 = sbr.rel (%p905) target = $region52
      $region51: #{tpu_custom_call.1} parent=43 // pred_region
        %s908 = smul.u32 4, %s23
        %p909 = scmp.lt.s32.totalorder %s22, 1
        %s910 = scalar_select %p909, %s22, 1
        %p911 = scmp.lt.s32.totalorder %s908, 3
        %s912 = scalar_select %p911, %s908, 3
        %s913 = smul.addr %s912, 2
        %s914 = smul.addr %s910, 8
        %s915 = sadd.s32 %s913, %s914
        %s916 = smul.addr %s915, 8
        %s917 = scalar_lea.vmem %s4, %s916
      $region52: #{tpu_custom_call.1} parent=43 // pred_fallthru
        _
    $region44: #{tpu_custom_call.1} parent=5 // pred_fallthru
      _
  $region6: #{tpu_custom_call.1} parent=0 // loop_footer
    %s15 = sadd.s32 1, %s11
  $region7: #{tpu_custom_call.1} parent=0 // loop_footer_branch
    %10 = sbr.rel target = $region3
  $region8: #{tpu_custom_call.1} parent=0 // loop_exit
    _

</llo_original>
